<compile_context>
chip_gen: v6e
topology: v6e:2x2x1
jax: 0.10.0
libtpu: 0.0.40
codegen_flags: <defaults>
</compile_context>

<pallas_src>
import functools

import jax
import jax.numpy as jnp
from jax.experimental import pallas as pl
from jax.experimental.pallas import tpu as pltpu


def _dim_attention_kernel(x_ref, par_ref, wpc_ref, out_ref, *, T, K, pad, L,
                          mm_dtype):
    """One grid step over a (C, L) tile; L = Bblk * T batch segments on lanes.

    x_ref  : (1, C, L)   input tile (source dtype)
    par_ref: (C, K + 2)  [ depthwise w (C,K) | depthwise bias | pointwise bias ]
    wpc_ref: (C, C)      pointwise (1x1) conv weights (out, in), f32
    out_ref: (1, C, L)   output tile (same dtype as x)
    """
    C = wpc_ref.shape[0]
    par = par_ref[...]
    w_dw = par[:, :K]                              # (C, K)
    b_dw = par[:, K:K + 1]                         # (C, 1)
    b_pc = par[:, K + 1:K + 2]                     # (C, 1)

    # Lane position within its length-T batch segment.  A tap whose source
    # falls outside its segment is zeroed -> identical to the per-sample zero
    # padding of the PyTorch conv / avg-pool (count_include_pad=True).
    pos = jax.lax.broadcasted_iota(jnp.int32, (1, L), 1) % T

    # Aligned tiles use the XLU lane-rotate; tiny unaligned tiles fall back to
    # the proven pad + static-slice lowering.
    use_roll = (L % 128 == 0) and (C % 8 == 0)

    def tap(v, k):
        delta = k - pad                            # source offset along time
        if delta == 0:                             # centre tap: free
            return v
        if use_roll:
            shifted = pltpu.roll(v, shift=(-delta) % L, axis=1)  # wraps
        else:
            zp = jnp.zeros((C, pad), jnp.float32)
            vp = jnp.concatenate([zp, v, zp], axis=1)            # (C, L+2*pad)
            shifted = vp[:, pad + delta: pad + delta + L]
        valid = (pos + delta >= 0) & (pos + delta < T)           # kill wrap/pad
        return jnp.where(valid, shifted, 0.0)

    x = x_ref[0].astype(jnp.float32)               # (C, L)

    # Depthwise conv along time (groups=C) + bias + relu; one tap at a time.
    conv = w_dw[:, pad:pad + 1] * x
    for k in range(K):
        if k == pad:
            continue
        conv = conv + w_dw[:, k:k + 1] * tap(x, k)
    conv_relu = jnp.maximum(conv + b_dw, 0.0)

    # Avg pool (kernel K, stride 1, zero padding, count_include_pad=True).
    pooled = conv_relu
    for k in range(K):
        if k == pad:
            continue
        pooled = pooled + tap(conv_relu, k)
    pooled = pooled * (1.0 / K)

    # Pointwise (1x1) conv across channels on the MXU: (C,C) @ (C,L) + bias.
    att = jnp.dot(wpc_ref[...].astype(mm_dtype), pooled.astype(mm_dtype),
                  preferred_element_type=jnp.float32) + b_pc

    # Softmax over channels (sublane axis).
    m = jnp.max(att, axis=0, keepdims=True)
    e = jnp.exp(att - m)
    s = jnp.sum(e, axis=0, keepdims=True)
    att_w = e * pl.reciprocal(s, approx=False)

    # Re-read x from VMEM here instead of keeping the top-of-kernel value live
    # through the whole body (shorter live range, fewer spills at large L).
    x_relu = jnp.maximum(x_ref[0].astype(jnp.float32), 0.0)
    out_ref[0] = (att_w * x_relu).astype(out_ref.dtype)


def _pick_block_batches(b, T, max_lanes, min_grid_steps=1, target_lanes=1024):
    """Number of batches folded onto the lane axis (only used when T < 128).

    Prefers lane widths that are multiples of 128 (unmasked stores) and close
    to ~1024 lanes (near-roofline tile size), bounded by the VMEM-derived
    `max_lanes`, leaving at least `min_grid_steps` grid steps (pass 2 on v7x
    so both TensorCores get work)."""
    divisors = [d for d in range(1, b + 1) if b % d == 0]
    feasible = [d for d in divisors
                if d * T <= max_lanes and b // d >= min_grid_steps]
    if not feasible:
        feasible = [1]
    aligned = [d for d in feasible if (d * T) % 128 == 0]
    pool = aligned if aligned else feasible
    under = [d for d in pool if d * T <= target_lanes]
    return max(under) if under else min(pool)


def dim_attention_forward(x, w_dw, b_dw, w_pc, b_pc, seg_att, *,
                          block_batches=None, min_grid_steps=1,
                          vmem_block_budget=32 << 20,
                          matmul_dtype=jnp.float32):
    """x: (b, n_c, dim, T).  Returns (b, n_c, dim, T) in x.dtype."""
    b, n_c, dim, T = x.shape
    C = n_c * dim
    K = int(seg_att)
    pad = K // 2
    assert K % 2 == 1, "module semantics assume odd seg_att (output length == T)"

    # Free reshape (contiguous dim merge); keep source dtype in HBM (no upcast).
    x2 = x.reshape(b, C, T)
    itemsize = x2.dtype.itemsize

    # Per-step VMEM model: double-buffered input + output tiles plus the
    # constant-index weight operands (conservatively double-buffered too).
    const_bytes = 2 * 4 * (C * C + C * (K + 2))
    per_lane_bytes = 2 * C * 2 * itemsize          # 2 bufs x (in + out) per lane
    max_lanes = max(T, (vmem_block_budget - const_bytes) // per_lane_bytes)

    if block_batches is not None:
        Bblk = int(block_batches)
        assert b % Bblk == 0
    elif T < 128 and b > 1:
        # Lane width would be tiny (masked stores, poor MXU N): fold batches.
        Bblk = _pick_block_batches(b, T, max_lanes, min_grid_steps)
    else:
        # T >= 128: iterate batches directly -> no HBM relayout in the wrapper.
        Bblk = 1
    fold = Bblk > 1

    G = b // Bblk
    L = Bblk * T

    if fold:
        # One extra HBM relayout pass each way; only taken when T < 128.
        x_in = x2.reshape(G, Bblk, C, T).transpose(0, 2, 1, 3).reshape(G, C, L)
    else:
        x_in = x2

    # Fuse the small per-channel params into one (C, K+2) operand (single DMA).
    params = jnp.concatenate(
        [jnp.asarray(w_dw, jnp.float32).reshape(C, K),
         jnp.asarray(b_dw, jnp.float32).reshape(C, 1),
         jnp.asarray(b_pc, jnp.float32).reshape(C, 1)], axis=1)
    wpc = jnp.asarray(w_pc, jnp.float32).reshape(C, C)

    need = per_lane_bytes * L + const_bytes
    # TODO(synk): for very large C*T (need > ~48 MiB) add a time-tiled variant
    # with halo exchange; a single (1, C, T) block will not fit v7x's 64 MiB VMEM.
    vmem_limit = int(min(max(need + need // 2 + (2 << 20), 32 << 20), 128 << 20))

    kernel = functools.partial(_dim_attention_kernel, T=T, K=K, pad=pad, L=L,
                               mm_dtype=matmul_dtype)

    cost = pl.CostEstimate(
        flops=int(G * (2 * C * C * L + (4 * K + 10) * C * L)),
        transcendentals=int(G * C * L),
        bytes_accessed=int(G * 2 * C * L * itemsize + 4 * (C * C + C * (K + 2))),
    )

    out_f = pl.pallas_call(
        kernel,
        out_shape=jax.ShapeDtypeStruct((G, C, L), x2.dtype),
        grid=(G,),
        in_specs=[
            pl.BlockSpec((1, C, L), lambda i: (i, 0, 0)),    # x (single copy)
            # Constant-index operands: Pallas fetches them once (index never
            # changes).  TODO(synk): add pipeline_mode=pl.Buffered(1) once the
            # target JAX version accepts it (saves one C*C*4B buffer on v7x).
            pl.BlockSpec((C, K + 2), lambda i: (0, 0)),      # fused small params
            pl.BlockSpec((C, C), lambda i: (0, 0)),          # pointwise weights
        ],
        out_specs=pl.BlockSpec((1, C, L), lambda i: (i, 0, 0)),
        compiler_params=pltpu.CompilerParams(
            dimension_semantics=("parallel",),
            vmem_limit_bytes=vmem_limit),
        cost_estimate=cost,
    )(x_in, params, wpc)

    if fold:
        out = out_f.reshape(G, C, Bblk, T).transpose(0, 2, 1, 3)
        return out.reshape(b, n_c, dim, T)
    return out_f.reshape(b, n_c, dim, T)


def reference_forward(x, w_dw, b_dw, w_pc, b_pc, seg_att):
    """Pure-JAX reference matching the PyTorch module semantics."""
    b, n_c, dim, T = x.shape
    C = n_c * dim
    pad = seg_att // 2
    xr = x.reshape(b, C, 1, T)
    conv = jax.lax.conv_general_dilated(
        xr, w_dw.reshape(C, 1, 1, seg_att),
        window_strides=(1, 1), padding=((0, 0), (pad, pad)),
        feature_group_count=C,
        dimension_numbers=("NCHW", "OIHW", "NCHW"))
    conv = conv + b_dw.reshape(1, C, 1, 1)
    att = jax.nn.relu(conv)
    pooled = jax.lax.reduce_window(
        att, 0.0, jax.lax.add,
        window_dimensions=(1, 1, 1, seg_att),
        window_strides=(1, 1, 1, 1),
        padding=((0, 0), (0, 0), (0, 0), (pad, pad))) / seg_att
    pw = jnp.einsum("oc,bchw->bohw", w_pc, pooled) + b_pc.reshape(1, C, 1, 1)
    att_w = jax.nn.softmax(pw, axis=1)
    out = att_w * jax.nn.relu(xr)
    return out.reshape(b, n_c, dim, T)


if __name__ == "__main__":
    def _check(b, n_c, dim, T, seg_att, key):
        C = n_c * dim
        k_x, k_wdw, k_bdw, k_wpc, k_bpc = jax.random.split(key, 5)
        x = jax.random.normal(k_x, (b, n_c, dim, T), dtype=jnp.float32)
        # att_conv: Conv2d(C, C, (1,K), groups=C) -> weight (C,1,1,K), bias (C,)
        w_dw = jax.random.normal(k_wdw, (C, seg_att), dtype=jnp.float32) * 0.1
        b_dw = jax.random.normal(k_bdw, (C,), dtype=jnp.float32) * 0.1
        # att_pointConv: Conv2d(C, C, (1,1)) -> weight (C,C,1,1), bias (C,)
        w_pc = jax.random.normal(k_wpc, (C, C), dtype=jnp.float32) * 0.1
        b_pc = jax.random.normal(k_bpc, (C,), dtype=jnp.float32) * 0.1

        out = jax.block_until_ready(
            dim_attention_forward(x, w_dw, b_dw, w_pc, b_pc, seg_att))
        ref = jax.block_until_ready(
            reference_forward(x, w_dw, b_dw, w_pc, b_pc, seg_att))
        assert out.shape == (b, n_c, dim, T)
        assert jnp.allclose(out, ref, rtol=1e-4, atol=1e-5), (
            f"max abs err {jnp.max(jnp.abs(out - ref))}")

    key = jax.random.PRNGKey(0)
    k1, k2 = jax.random.split(key)
    # Small module-consistent shapes: batch=2, n_c=4, dim=8, T=16 (lane-fold path).
    _check(2, 4, 8, 16, 5, k1)
    # T=128 exercises the no-relayout path (grid over batches, 128-lane blocks,
    # roll-based taps).
    _check(2, 4, 8, 128, 5, k2)

    print("KERNEL_OK")
</pallas_src>

<mosaic_0001>
module attributes {stable_mosaic.version = 11 : i64} {
  func.func @_dim_attention_kernel(%arg0: i32, %arg1: memref<1x32x32xf32, #tpu.memory_space<vmem>>, %arg2: memref<32x7xf32, #tpu.memory_space<vmem>>, %arg3: memref<32x32xf32, #tpu.memory_space<vmem>>, %arg4: memref<1x32x32xf32, #tpu.memory_space<vmem>>) attributes {dimension_semantics = [#tpu.dimension_semantics<parallel>], iteration_bounds = array<i64: 1>, scalar_prefetch = 0 : i64, scratch_operands = 0 : i64, tpu.core_type = #tpu.core_type<tc>, window_params = [{transform_indices = @transform_0, window_bounds = array<i64: 1, 32, 32>}, {pipeline_mode = #tpu.pipeline_mode<synchronous>, transform_indices = @transform_1, window_bounds = array<i64: 32, 7>}, {pipeline_mode = #tpu.pipeline_mode<synchronous>, transform_indices = @transform_2, window_bounds = array<i64: 32, 32>}, {transform_indices = @transform_3, window_bounds = array<i64: 1, 32, 32>}]} {
    %c0 = arith.constant 0 : index
    %c0_0 = arith.constant 0 : index
    %0 = vector.load %arg2[%c0, %c0_0] : memref<32x7xf32, #tpu.memory_space<vmem>>, vector<32x7xf32>
    %1 = vector.extract_strided_slice %0 {offsets = [0, 0], sizes = [32, 5], strides = [1, 1]} : vector<32x7xf32> to vector<32x5xf32>
    %2 = vector.extract_strided_slice %0 {offsets = [0, 5], sizes = [32, 1], strides = [1, 1]} : vector<32x7xf32> to vector<32x1xf32>
    %3 = vector.extract_strided_slice %0 {offsets = [0, 6], sizes = [32, 1], strides = [1, 1]} : vector<32x7xf32> to vector<32x1xf32>
    %4 = tpu.iota {dimensions = array<i32: 1>} : vector<1x32xi32>
    %c16_i32 = arith.constant 16 : i32
    %c0_i32 = arith.constant 0 : i32
    %5 = arith.cmpi eq, %c16_i32, %c0_i32 : i32
    %c1_i32 = arith.constant 1 : i32
    %6 = arith.select %5, %c1_i32, %c16_i32 : i32
    %7 = vector.broadcast %6 : i32 to vector<1x32xi32>
    %8 = arith.remsi %4, %7 : vector<1x32xi32>
    %c0_i32_1 = arith.constant 0 : i32
    %9 = vector.broadcast %c0_i32_1 : i32 to vector<1x32xi32>
    %10 = arith.cmpi ne, %8, %9 : vector<1x32xi32>
    %c0_i32_2 = arith.constant 0 : i32
    %11 = vector.broadcast %c0_i32_2 : i32 to vector<1x32xi32>
    %12 = arith.cmpi slt, %8, %11 : vector<1x32xi32>
    %c0_i32_3 = arith.constant 0 : i32
    %13 = arith.cmpi slt, %6, %c0_i32_3 : i32
    %14 = vector.broadcast %13 : i1 to vector<1x32xi1>
    %15 = vector.broadcast %14 : vector<1x32xi1> to vector<1x32xi1>
    %16 = arith.xori %12, %15 : vector<1x32xi1>
    %17 = arith.andi %16, %10 : vector<1x32xi1>
    %18 = vector.broadcast %6 : i32 to vector<1x32xi32>
    %19 = arith.addi %8, %18 : vector<1x32xi32>
    %20 = arith.select %17, %19, %8 : vector<1x32xi1>, vector<1x32xi32>
    %c0_4 = arith.constant 0 : index
    %c0_5 = arith.constant 0 : index
    %c0_6 = arith.constant 0 : index
    %21 = vector.load %arg1[%c0_4, %c0_5, %c0_6] : memref<1x32x32xf32, #tpu.memory_space<vmem>>, vector<1x32x32xf32>
    %22 = vector.shape_cast %21 : vector<1x32x32xf32> to vector<32x32xf32>
    %23 = vector.extract_strided_slice %1 {offsets = [0, 2], sizes = [32, 1], strides = [1, 1]} : vector<32x5xf32> to vector<32x1xf32>
    %24 = vector.broadcast %23 : vector<32x1xf32> to vector<32x32xf32>
    %25 = arith.mulf %24, %22 : vector<32x32xf32>
    %26 = vector.extract_strided_slice %1 {offsets = [0, 0], sizes = [32, 1], strides = [1, 1]} : vector<32x5xf32> to vector<32x1xf32>
    %cst = arith.constant 0.000000e+00 : f32
    %27 = vector.broadcast %cst : f32 to vector<32x2xf32>
    %28 = tpu.concatenate %27, %22, %27 in 1 : vector<32x2xf32>, vector<32x32xf32>, vector<32x2xf32> -> vector<32x36xf32>
    %29 = vector.extract_strided_slice %28 {offsets = [0, 0], sizes = [32, 32], strides = [1, 1]} : vector<32x36xf32> to vector<32x32xf32>
    %c-2_i32 = arith.constant -2 : i32
    %30 = vector.broadcast %c-2_i32 : i32 to vector<1x32xi32>
    %31 = arith.addi %20, %30 : vector<1x32xi32>
    %c0_i32_7 = arith.constant 0 : i32
    %32 = vector.broadcast %c0_i32_7 : i32 to vector<1x32xi32>
    %33 = arith.cmpi sge, %31, %32 : vector<1x32xi32>
    %c-2_i32_8 = arith.constant -2 : i32
    %34 = vector.broadcast %c-2_i32_8 : i32 to vector<1x32xi32>
    %35 = arith.addi %20, %34 : vector<1x32xi32>
    %c16_i32_9 = arith.constant 16 : i32
    %36 = vector.broadcast %c16_i32_9 : i32 to vector<1x32xi32>
    %37 = arith.cmpi slt, %35, %36 : vector<1x32xi32>
    %38 = arith.andi %33, %37 : vector<1x32xi1>
    %cst_10 = arith.constant 0.000000e+00 : f32
    %39 = vector.shape_cast %38 : vector<1x32xi1> to vector<1x32xi1>
    %40 = vector.broadcast %39 : vector<1x32xi1> to vector<32x32xi1>
    %41 = vector.broadcast %cst_10 : f32 to vector<32x32xf32>
    %42 = arith.select %40, %29, %41 : vector<32x32xi1>, vector<32x32xf32>
    %43 = vector.broadcast %26 : vector<32x1xf32> to vector<32x32xf32>
    %44 = arith.mulf %43, %42 : vector<32x32xf32>
    %45 = arith.addf %25, %44 : vector<32x32xf32>
    %46 = vector.extract_strided_slice %1 {offsets = [0, 1], sizes = [32, 1], strides = [1, 1]} : vector<32x5xf32> to vector<32x1xf32>
    %cst_11 = arith.constant 0.000000e+00 : f32
    %47 = vector.broadcast %cst_11 : f32 to vector<32x2xf32>
    %48 = tpu.concatenate %47, %22, %47 in 1 : vector<32x2xf32>, vector<32x32xf32>, vector<32x2xf32> -> vector<32x36xf32>
    %49 = vector.extract_strided_slice %48 {offsets = [0, 1], sizes = [32, 32], strides = [1, 1]} : vector<32x36xf32> to vector<32x32xf32>
    %c-1_i32 = arith.constant -1 : i32
    %50 = vector.broadcast %c-1_i32 : i32 to vector<1x32xi32>
    %51 = arith.addi %20, %50 : vector<1x32xi32>
    %c0_i32_12 = arith.constant 0 : i32
    %52 = vector.broadcast %c0_i32_12 : i32 to vector<1x32xi32>
    %53 = arith.cmpi sge, %51, %52 : vector<1x32xi32>
    %c-1_i32_13 = arith.constant -1 : i32
    %54 = vector.broadcast %c-1_i32_13 : i32 to vector<1x32xi32>
    %55 = arith.addi %20, %54 : vector<1x32xi32>
    %c16_i32_14 = arith.constant 16 : i32
    %56 = vector.broadcast %c16_i32_14 : i32 to vector<1x32xi32>
    %57 = arith.cmpi slt, %55, %56 : vector<1x32xi32>
    %58 = arith.andi %53, %57 : vector<1x32xi1>
    %cst_15 = arith.constant 0.000000e+00 : f32
    %59 = vector.shape_cast %58 : vector<1x32xi1> to vector<1x32xi1>
    %60 = vector.broadcast %59 : vector<1x32xi1> to vector<32x32xi1>
    %61 = vector.broadcast %cst_15 : f32 to vector<32x32xf32>
    %62 = arith.select %60, %49, %61 : vector<32x32xi1>, vector<32x32xf32>
    %63 = vector.broadcast %46 : vector<32x1xf32> to vector<32x32xf32>
    %64 = arith.mulf %63, %62 : vector<32x32xf32>
    %65 = arith.addf %45, %64 : vector<32x32xf32>
    %66 = vector.extract_strided_slice %1 {offsets = [0, 3], sizes = [32, 1], strides = [1, 1]} : vector<32x5xf32> to vector<32x1xf32>
    %cst_16 = arith.constant 0.000000e+00 : f32
    %67 = vector.broadcast %cst_16 : f32 to vector<32x2xf32>
    %68 = tpu.concatenate %67, %22, %67 in 1 : vector<32x2xf32>, vector<32x32xf32>, vector<32x2xf32> -> vector<32x36xf32>
    %69 = vector.extract_strided_slice %68 {offsets = [0, 3], sizes = [32, 32], strides = [1, 1]} : vector<32x36xf32> to vector<32x32xf32>
    %c1_i32_17 = arith.constant 1 : i32
    %70 = vector.broadcast %c1_i32_17 : i32 to vector<1x32xi32>
    %71 = arith.addi %20, %70 : vector<1x32xi32>
    %c0_i32_18 = arith.constant 0 : i32
    %72 = vector.broadcast %c0_i32_18 : i32 to vector<1x32xi32>
    %73 = arith.cmpi sge, %71, %72 : vector<1x32xi32>
    %c1_i32_19 = arith.constant 1 : i32
    %74 = vector.broadcast %c1_i32_19 : i32 to vector<1x32xi32>
    %75 = arith.addi %20, %74 : vector<1x32xi32>
    %c16_i32_20 = arith.constant 16 : i32
    %76 = vector.broadcast %c16_i32_20 : i32 to vector<1x32xi32>
    %77 = arith.cmpi slt, %75, %76 : vector<1x32xi32>
    %78 = arith.andi %73, %77 : vector<1x32xi1>
    %cst_21 = arith.constant 0.000000e+00 : f32
    %79 = vector.shape_cast %78 : vector<1x32xi1> to vector<1x32xi1>
    %80 = vector.broadcast %79 : vector<1x32xi1> to vector<32x32xi1>
    %81 = vector.broadcast %cst_21 : f32 to vector<32x32xf32>
    %82 = arith.select %80, %69, %81 : vector<32x32xi1>, vector<32x32xf32>
    %83 = vector.broadcast %66 : vector<32x1xf32> to vector<32x32xf32>
    %84 = arith.mulf %83, %82 : vector<32x32xf32>
    %85 = arith.addf %65, %84 : vector<32x32xf32>
    %86 = vector.extract_strided_slice %1 {offsets = [0, 4], sizes = [32, 1], strides = [1, 1]} : vector<32x5xf32> to vector<32x1xf32>
    %cst_22 = arith.constant 0.000000e+00 : f32
    %87 = vector.broadcast %cst_22 : f32 to vector<32x2xf32>
    %88 = tpu.concatenate %87, %22, %87 in 1 : vector<32x2xf32>, vector<32x32xf32>, vector<32x2xf32> -> vector<32x36xf32>
    %89 = vector.extract_strided_slice %88 {offsets = [0, 4], sizes = [32, 32], strides = [1, 1]} : vector<32x36xf32> to vector<32x32xf32>
    %c2_i32 = arith.constant 2 : i32
    %90 = vector.broadcast %c2_i32 : i32 to vector<1x32xi32>
    %91 = arith.addi %20, %90 : vector<1x32xi32>
    %c0_i32_23 = arith.constant 0 : i32
    %92 = vector.broadcast %c0_i32_23 : i32 to vector<1x32xi32>
    %93 = arith.cmpi sge, %91, %92 : vector<1x32xi32>
    %c2_i32_24 = arith.constant 2 : i32
    %94 = vector.broadcast %c2_i32_24 : i32 to vector<1x32xi32>
    %95 = arith.addi %20, %94 : vector<1x32xi32>
    %c16_i32_25 = arith.constant 16 : i32
    %96 = vector.broadcast %c16_i32_25 : i32 to vector<1x32xi32>
    %97 = arith.cmpi slt, %95, %96 : vector<1x32xi32>
    %98 = arith.andi %93, %97 : vector<1x32xi1>
    %cst_26 = arith.constant 0.000000e+00 : f32
    %99 = vector.shape_cast %98 : vector<1x32xi1> to vector<1x32xi1>
    %100 = vector.broadcast %99 : vector<1x32xi1> to vector<32x32xi1>
    %101 = vector.broadcast %cst_26 : f32 to vector<32x32xf32>
    %102 = arith.select %100, %89, %101 : vector<32x32xi1>, vector<32x32xf32>
    %103 = vector.broadcast %86 : vector<32x1xf32> to vector<32x32xf32>
    %104 = arith.mulf %103, %102 : vector<32x32xf32>
    %105 = arith.addf %85, %104 : vector<32x32xf32>
    %106 = vector.broadcast %2 : vector<32x1xf32> to vector<32x32xf32>
    %107 = arith.addf %105, %106 : vector<32x32xf32>
    %cst_27 = arith.constant 0.000000e+00 : f32
    %108 = vector.broadcast %cst_27 : f32 to vector<32x32xf32>
    %109 = arith.maximumf %107, %108 : vector<32x32xf32>
    %cst_28 = arith.constant 0.000000e+00 : f32
    %110 = vector.broadcast %cst_28 : f32 to vector<32x2xf32>
    %111 = tpu.concatenate %110, %109, %110 in 1 : vector<32x2xf32>, vector<32x32xf32>, vector<32x2xf32> -> vector<32x36xf32>
    %112 = vector.extract_strided_slice %111 {offsets = [0, 0], sizes = [32, 32], strides = [1, 1]} : vector<32x36xf32> to vector<32x32xf32>
    %c-2_i32_29 = arith.constant -2 : i32
    %113 = vector.broadcast %c-2_i32_29 : i32 to vector<1x32xi32>
    %114 = arith.addi %20, %113 : vector<1x32xi32>
    %c0_i32_30 = arith.constant 0 : i32
    %115 = vector.broadcast %c0_i32_30 : i32 to vector<1x32xi32>
    %116 = arith.cmpi sge, %114, %115 : vector<1x32xi32>
    %c-2_i32_31 = arith.constant -2 : i32
    %117 = vector.broadcast %c-2_i32_31 : i32 to vector<1x32xi32>
    %118 = arith.addi %20, %117 : vector<1x32xi32>
    %c16_i32_32 = arith.constant 16 : i32
    %119 = vector.broadcast %c16_i32_32 : i32 to vector<1x32xi32>
    %120 = arith.cmpi slt, %118, %119 : vector<1x32xi32>
    %121 = arith.andi %116, %120 : vector<1x32xi1>
    %cst_33 = arith.constant 0.000000e+00 : f32
    %122 = vector.shape_cast %121 : vector<1x32xi1> to vector<1x32xi1>
    %123 = vector.broadcast %122 : vector<1x32xi1> to vector<32x32xi1>
    %124 = vector.broadcast %cst_33 : f32 to vector<32x32xf32>
    %125 = arith.select %123, %112, %124 : vector<32x32xi1>, vector<32x32xf32>
    %126 = arith.addf %109, %125 : vector<32x32xf32>
    %cst_34 = arith.constant 0.000000e+00 : f32
    %127 = vector.broadcast %cst_34 : f32 to vector<32x2xf32>
    %128 = tpu.concatenate %127, %109, %127 in 1 : vector<32x2xf32>, vector<32x32xf32>, vector<32x2xf32> -> vector<32x36xf32>
    %129 = vector.extract_strided_slice %128 {offsets = [0, 1], sizes = [32, 32], strides = [1, 1]} : vector<32x36xf32> to vector<32x32xf32>
    %c-1_i32_35 = arith.constant -1 : i32
    %130 = vector.broadcast %c-1_i32_35 : i32 to vector<1x32xi32>
    %131 = arith.addi %20, %130 : vector<1x32xi32>
    %c0_i32_36 = arith.constant 0 : i32
    %132 = vector.broadcast %c0_i32_36 : i32 to vector<1x32xi32>
    %133 = arith.cmpi sge, %131, %132 : vector<1x32xi32>
    %c-1_i32_37 = arith.constant -1 : i32
    %134 = vector.broadcast %c-1_i32_37 : i32 to vector<1x32xi32>
    %135 = arith.addi %20, %134 : vector<1x32xi32>
    %c16_i32_38 = arith.constant 16 : i32
    %136 = vector.broadcast %c16_i32_38 : i32 to vector<1x32xi32>
    %137 = arith.cmpi slt, %135, %136 : vector<1x32xi32>
    %138 = arith.andi %133, %137 : vector<1x32xi1>
    %cst_39 = arith.constant 0.000000e+00 : f32
    %139 = vector.shape_cast %138 : vector<1x32xi1> to vector<1x32xi1>
    %140 = vector.broadcast %139 : vector<1x32xi1> to vector<32x32xi1>
    %141 = vector.broadcast %cst_39 : f32 to vector<32x32xf32>
    %142 = arith.select %140, %129, %141 : vector<32x32xi1>, vector<32x32xf32>
    %143 = arith.addf %126, %142 : vector<32x32xf32>
    %cst_40 = arith.constant 0.000000e+00 : f32
    %144 = vector.broadcast %cst_40 : f32 to vector<32x2xf32>
    %145 = tpu.concatenate %144, %109, %144 in 1 : vector<32x2xf32>, vector<32x32xf32>, vector<32x2xf32> -> vector<32x36xf32>
    %146 = vector.extract_strided_slice %145 {offsets = [0, 3], sizes = [32, 32], strides = [1, 1]} : vector<32x36xf32> to vector<32x32xf32>
    %c1_i32_41 = arith.constant 1 : i32
    %147 = vector.broadcast %c1_i32_41 : i32 to vector<1x32xi32>
    %148 = arith.addi %20, %147 : vector<1x32xi32>
    %c0_i32_42 = arith.constant 0 : i32
    %149 = vector.broadcast %c0_i32_42 : i32 to vector<1x32xi32>
    %150 = arith.cmpi sge, %148, %149 : vector<1x32xi32>
    %c1_i32_43 = arith.constant 1 : i32
    %151 = vector.broadcast %c1_i32_43 : i32 to vector<1x32xi32>
    %152 = arith.addi %20, %151 : vector<1x32xi32>
    %c16_i32_44 = arith.constant 16 : i32
    %153 = vector.broadcast %c16_i32_44 : i32 to vector<1x32xi32>
    %154 = arith.cmpi slt, %152, %153 : vector<1x32xi32>
    %155 = arith.andi %150, %154 : vector<1x32xi1>
    %cst_45 = arith.constant 0.000000e+00 : f32
    %156 = vector.shape_cast %155 : vector<1x32xi1> to vector<1x32xi1>
    %157 = vector.broadcast %156 : vector<1x32xi1> to vector<32x32xi1>
    %158 = vector.broadcast %cst_45 : f32 to vector<32x32xf32>
    %159 = arith.select %157, %146, %158 : vector<32x32xi1>, vector<32x32xf32>
    %160 = arith.addf %143, %159 : vector<32x32xf32>
    %cst_46 = arith.constant 0.000000e+00 : f32
    %161 = vector.broadcast %cst_46 : f32 to vector<32x2xf32>
    %162 = tpu.concatenate %161, %109, %161 in 1 : vector<32x2xf32>, vector<32x32xf32>, vector<32x2xf32> -> vector<32x36xf32>
    %163 = vector.extract_strided_slice %162 {offsets = [0, 4], sizes = [32, 32], strides = [1, 1]} : vector<32x36xf32> to vector<32x32xf32>
    %c2_i32_47 = arith.constant 2 : i32
    %164 = vector.broadcast %c2_i32_47 : i32 to vector<1x32xi32>
    %165 = arith.addi %20, %164 : vector<1x32xi32>
    %c0_i32_48 = arith.constant 0 : i32
    %166 = vector.broadcast %c0_i32_48 : i32 to vector<1x32xi32>
    %167 = arith.cmpi sge, %165, %166 : vector<1x32xi32>
    %c2_i32_49 = arith.constant 2 : i32
    %168 = vector.broadcast %c2_i32_49 : i32 to vector<1x32xi32>
    %169 = arith.addi %20, %168 : vector<1x32xi32>
    %c16_i32_50 = arith.constant 16 : i32
    %170 = vector.broadcast %c16_i32_50 : i32 to vector<1x32xi32>
    %171 = arith.cmpi slt, %169, %170 : vector<1x32xi32>
    %172 = arith.andi %167, %171 : vector<1x32xi1>
    %cst_51 = arith.constant 0.000000e+00 : f32
    %173 = vector.shape_cast %172 : vector<1x32xi1> to vector<1x32xi1>
    %174 = vector.broadcast %173 : vector<1x32xi1> to vector<32x32xi1>
    %175 = vector.broadcast %cst_51 : f32 to vector<32x32xf32>
    %176 = arith.select %174, %163, %175 : vector<32x32xi1>, vector<32x32xf32>
    %177 = arith.addf %160, %176 : vector<32x32xf32>
    %cst_52 = arith.constant 2.000000e-01 : f32
    %178 = vector.broadcast %cst_52 : f32 to vector<32x32xf32>
    %179 = arith.mulf %177, %178 : vector<32x32xf32>
    %c0_53 = arith.constant 0 : index
    %c0_54 = arith.constant 0 : index
    %180 = vector.load %arg3[%c0_53, %c0_54] : memref<32x32xf32, #tpu.memory_space<vmem>>, vector<32x32xf32>
    %cst_55 = arith.constant dense<0.000000e+00> : vector<32x32xf32>
    %181 = tpu.matmul %180, %179, %cst_55 {dimension_numbers = #tpu.dot_dimension_numbers<[1], [0], [0], [1], [0, 0, 1, 1], [], []>} : vector<32x32xf32>, vector<32x32xf32>, vector<32x32xf32> -> vector<32x32xf32>
    %182 = vector.broadcast %3 : vector<32x1xf32> to vector<32x32xf32>
    %183 = arith.addf %181, %182 : vector<32x32xf32>
    %cst_56 = arith.constant dense<0xFF800000> : vector<32xf32>
    %184 = vector.multi_reduction <maximumf>, %183, %cst_56 [0] : vector<32x32xf32> to vector<32xf32>
    %185 = vector.shape_cast %184 : vector<32xf32> to vector<1x32xf32>
    %186 = vector.broadcast %185 : vector<1x32xf32> to vector<32x32xf32>
    %187 = arith.subf %183, %186 : vector<32x32xf32>
    %188 = math.exp %187 : vector<32x32xf32>
    %cst_57 = arith.constant dense<0.000000e+00> : vector<32xf32>
    %189 = vector.multi_reduction <add>, %188, %cst_57 [0] : vector<32x32xf32> to vector<32xf32>
    %190 = vector.shape_cast %189 : vector<32xf32> to vector<1x32xf32>
    %191 = tpu.reciprocal %190 : vector<1x32xf32> -> vector<1x32xf32>
    %192 = vector.broadcast %191 : vector<1x32xf32> to vector<32x32xf32>
    %193 = arith.mulf %188, %192 : vector<32x32xf32>
    %c0_58 = arith.constant 0 : index
    %c0_59 = arith.constant 0 : index
    %c0_60 = arith.constant 0 : index
    %194 = vector.load %arg1[%c0_58, %c0_59, %c0_60] : memref<1x32x32xf32, #tpu.memory_space<vmem>>, vector<1x32x32xf32>
    %195 = vector.shape_cast %194 : vector<1x32x32xf32> to vector<32x32xf32>
    %cst_61 = arith.constant 0.000000e+00 : f32
    %196 = vector.broadcast %cst_61 : f32 to vector<32x32xf32>
    %197 = arith.maximumf %195, %196 : vector<32x32xf32>
    %198 = arith.mulf %193, %197 : vector<32x32xf32>
    %c0_62 = arith.constant 0 : index
    %c0_63 = arith.constant 0 : index
    %c0_64 = arith.constant 0 : index
    %199 = vector.load %arg4[%c0_62, %c0_63, %c0_64] : memref<1x32x32xf32, #tpu.memory_space<vmem>>, vector<1x32x32xf32>
    %200 = vector.shape_cast %199 : vector<1x32x32xf32> to vector<32x32xf32>
    %201 = vector.shape_cast %198 : vector<32x32xf32> to vector<1x32x32xf32>
    tpu.vector_store %arg4[%c0_62, %c0_63, %c0_64], %201 {strides = array<i32>} : memref<1x32x32xf32, #tpu.memory_space<vmem>>, vector<1x32x32xf32>,
    return
  }
  func.func @transform_0(%arg0: i32) -> (i32, i32, i32) {
    %c0_i32 = arith.constant 0 : i32
    %c0_i32_0 = arith.constant 0 : i32
    %c0_i32_1 = arith.constant 0 : i32
    return %arg0, %c0_i32, %c0_i32_0 : i32, i32, i32
  }
  func.func @transform_1(%arg0: i32) -> (i32, i32) {
    %c0_i32 = arith.constant 0 : i32
    %c0_i32_0 = arith.constant 0 : i32
    %c0_i32_1 = arith.constant 0 : i32
    return %c0_i32, %c0_i32_0 : i32, i32
  }
  func.func @transform_2(%arg0: i32) -> (i32, i32) {
    %c0_i32 = arith.constant 0 : i32
    %c0_i32_0 = arith.constant 0 : i32
    %c0_i32_1 = arith.constant 0 : i32
    return %c0_i32, %c0_i32_0 : i32, i32
  }
  func.func @transform_3(%arg0: i32) -> (i32, i32, i32) {
    %c0_i32 = arith.constant 0 : i32
    %c0_i32_0 = arith.constant 0 : i32
    %c0_i32_1 = arith.constant 0 : i32
    return %arg0, %c0_i32, %c0_i32_0 : i32, i32, i32
  }
}

</mosaic_0001>

<llo_original>
// kernel: tpu_custom_call.1
$region0: #{tpu_custom_call.1}
  #allocation0 [shape = 'u32[]', space=smem, size = 0x4, offset = 0x4, fixed_abs, tag = 'smem constant byte address 0x4 - core index']
  #allocation1 [shape = 'u32[144,128]{1,0:T(1,128)}', space=vmem, size = 0x12000, scoped, tag = 'internal scratch']
  %s0 = inlined_call_operand.vmem [shape: f32[1,32,32], index: 0, kind: input, shape index: {}]
  %s1 = inlined_call_operand.vmem [shape: f32[32,7], index: 1, kind: input, shape index: {}]
  %s2 = inlined_call_operand.hbm [shape: f32[32,32], index: 2, kind: input, shape index: {}]
  %s3 = inlined_call_operand.hbm [shape: f32[1,32,32], index: 3, kind: output, shape index: {}]
  %s4 = sld [smem:[#allocation0]]
  $region26: #{tpu_custom_call.1} parent=0
    _
  %s6 = ssub.s32 1, %s4
  %s7 = scalar_select 0, %s6, %s4
  $region1: #{tpu_custom_call.1} parent=0
    #allocation2 [shape = 'u8[16384]{0}', space=vmem, size = 0x4000, scoped, tag = 'input window, operand 2, single buffered']
    #allocation3 [shape = 's32[1]{0}', space=sflag, size = 0x4, scoped, tag = 'scoped memory for tpu_custom_call.1']
    #allocation4 [shape = 's32[1]{0}', space=sflag, size = 0x4, scoped, tag = 'scoped memory for tpu_custom_call.1']
    #allocation5 [shape = 'u8[16384]{0}', space=vmem, size = 0x4000, scoped, tag = 'output window, operand 0, single buffered']
    %8 = vsyncpa [#allocation3], 0
    %9 = vsyncpa [#allocation4], 0
    // Predicated region
    $region2: #{tpu_custom_call.1} parent=1 // pred_check
      _
    $region3: #{tpu_custom_call.1} parent=1 // pred_check_branch
      %11 = sbr.rel (0) target = $region5
    $region4: #{tpu_custom_call.1} parent=1 // pred_region
      _
    $region5: #{tpu_custom_call.1} parent=1 // pred_fallthru
      _
    // Predicated region
    $region6: #{tpu_custom_call.1} parent=1 // pred_check
      _
    $region7: #{tpu_custom_call.1} parent=1 // pred_check_branch
      %13 = sbr.rel (0) target = $region9
    $region8: #{tpu_custom_call.1} parent=1 // pred_region
      _
    $region9: #{tpu_custom_call.1} parent=1 // pred_fallthru
      _
    // Predicated region
    $region10: #{tpu_custom_call.1} parent=1 // pred_check
      _
    $region11: #{tpu_custom_call.1} parent=1 // pred_check_branch
      %15 = sbr.rel (0) target = $region13
    $region12: #{tpu_custom_call.1} parent=1 // pred_region
      %s17 = ssub.s32 512, 512
      %18 = vsyncadd [#allocation3], %s17
      %s19 = sshll.u32 [#allocation2], 4
      %s20 = int_to_ptr.vmem [resolvable:$true] %s19
      %25 = dma.hbm_to_vmem [thread:$0]  %s2, 512, %s20, [#allocation3], 128, 128, 8
    $region13: #{tpu_custom_call.1} parent=1 // pred_fallthru
      _
    // Predicated region
    $region14: #{tpu_custom_call.1} parent=1 // pred_check
      _
    $region15: #{tpu_custom_call.1} parent=1 // pred_check_branch
      %27 = sbr.rel (0) target = $region17
    $region16: #{tpu_custom_call.1} parent=1 // pred_region
      %28 = dma.done [#allocation3], 512
    $region17: #{tpu_custom_call.1} parent=1 // pred_fallthru
      _
    %v29 = vld [vmem:[%s1] sm:$0xff]
    %v30 = vld [vmem:[%s1 + $0x8] sm:$0xff]
    %v31 = vld [vmem:[%s1 + $0x10] sm:$0xff]
    %v32 = vld [vmem:[%s1 + $0x18] sm:$0xff]
    %v33 = vlaneseq
    %v34 = vand.u32 %v33, 127
    %vm35 = vcmp.lt.s32.totalorder %v34, 0
    %v36 = vsub.s32 0, %v34
    %v37 = vsel %vm35, %v36, %v34
    %v38 = vshrl.u32 %v37, 4
    %v39 = vand.u32 %v37, 15
    %v40 = vsub.s32 0, %v39
    %v41 = vsel %vm35, %v40, %v39
    %vm42 = vcmp.ne.s32.totalorder %v41, 0
    %vm43 = vcmp.lt.s32.totalorder %v41, 0
    %vm44 = vmand %vm43, %vm42
    %v45 = vadd.s32 %v41, 16
    %v46 = vsel %vm44, %v45, %v41
    %v47 = vld [vmem:[%s0] sm:$0xff]
    %v48 = vld [vmem:[%s0 + $0x8] sm:$0xff]
    %v49 = vld [vmem:[%s0 + $0x10] sm:$0xff]
    %v50 = vld [vmem:[%s0 + $0x18] sm:$0xff]
    %52 = vset.pattern.permute.xlu0 2
    %53 = vperm.xlu0 %52, %v29
    %v54 = vpop.permute.xlu0 %53
    %57 = vset.pattern.permute.xlu0 2
    %58 = vperm.xlu0 %57, %v30
    %v59 = vpop.permute.xlu0 %58
    %62 = vset.pattern.permute.xlu0 2
    %63 = vperm.xlu0 %62, %v31
    %v64 = vpop.permute.xlu0 %63
    %67 = vset.pattern.permute.xlu0 2
    %68 = vperm.xlu0 %67, %v32
    %v69 = vpop.permute.xlu0 %68
    %v71 = vmul.f32 %v54, %v47
    %v72 = vmul.f32 %v59, %v48
    %v73 = vmul.f32 %v64, %v49
    %v74 = vmul.f32 %v69, %v50
    %79 = vrot.lane.b32.xlu0 %v47, 2
    %v80 = vpop.permute.xlu0 %79
    %81 = vrot.lane.b32.xlu0 %v48, 2
    %v82 = vpop.permute.xlu0 %81
    %83 = vrot.lane.b32.xlu0 %v49, 2
    %v84 = vpop.permute.xlu0 %83
    %85 = vrot.lane.b32.xlu0 %v50, 2
    %v86 = vpop.permute.xlu0 %85
    %vm91 = vcmask 15360
    %v92 = vsel %vm91, 0.0, %v80
    %v93 = vsel %vm91, 0.0, %v82
    %v94 = vsel %vm91, 0.0, %v84
    %v95 = vsel %vm91, 0.0, %v86
    %vm96 = vcmask 277504
    %v97 = vsel %vm96, %v92, 0.0
    %v98 = vsel %vm96, %v93, 0.0
    %v99 = vsel %vm96, %v94, 0.0
    %v100 = vsel %vm96, %v95, 0.0
    %v101 = vadd.s32 %v46, 4294967294
    %vm102 = vcmp.ge.s32.totalorder %v101, 0
    %vm103 = vcmp.lt.s32.totalorder %v101, 16
    %vm104 = vmand %vm102, %vm103
    %v105 = vsel %vm104, 1, 0
    %vm106 = vcmp.eq.s32.totalorder %v105, 1
    %v107 = vsel %vm106, %v97, 0.0
    %v108 = vsel %vm106, %v98, 0.0
    %v109 = vsel %vm106, %v99, 0.0
    %v110 = vsel %vm106, %v100, 0.0
    %111 = vset.pattern.permute.xlu0 0
    %112 = vperm.xlu0 %111, %v29
    %v113 = vpop.permute.xlu0 %112
    %115 = vset.pattern.permute.xlu0 0
    %116 = vperm.xlu0 %115, %v30
    %v117 = vpop.permute.xlu0 %116
    %119 = vset.pattern.permute.xlu0 0
    %120 = vperm.xlu0 %119, %v31
    %v121 = vpop.permute.xlu0 %120
    %123 = vset.pattern.permute.xlu0 0
    %124 = vperm.xlu0 %123, %v32
    %v125 = vpop.permute.xlu0 %124
    %v127 = vmul.f32 %v113, %v107
    %v128 = vmul.f32 %v117, %v108
    %v129 = vmul.f32 %v121, %v109
    %v130 = vmul.f32 %v125, %v110
    %v131 = vadd.f32 %v71, %v127
    %v132 = vadd.f32 %v72, %v128
    %v133 = vadd.f32 %v73, %v129
    %v134 = vadd.f32 %v74, %v130
    %v135 = vadd.s32 %v46, 4294967295
    %vm136 = vcmp.ge.s32.totalorder %v135, 0
    %vm137 = vcmp.lt.s32.totalorder %v135, 16
    %vm138 = vmand %vm136, %vm137
    %v139 = vsel %vm138, 1, 0
    %vm140 = vcmp.eq.s32.totalorder %v139, 1
    %145 = vrot.lane.b32.xlu0 %v97, 127
    %v146 = vpop.permute.xlu0 %145
    %147 = vrot.lane.b32.xlu0 %v98, 127
    %v148 = vpop.permute.xlu0 %147
    %149 = vrot.lane.b32.xlu0 %v99, 127
    %v150 = vpop.permute.xlu0 %149
    %151 = vrot.lane.b32.xlu0 %v100, 127
    %v152 = vpop.permute.xlu0 %151
    %v157 = vsel %vm140, %v146, 0.0
    %v158 = vsel %vm140, %v148, 0.0
    %v159 = vsel %vm140, %v150, 0.0
    %v160 = vsel %vm140, %v152, 0.0
    %161 = vset.pattern.permute.xlu0 1
    %162 = vperm.xlu0 %161, %v29
    %v163 = vpop.permute.xlu0 %162
    %165 = vset.pattern.permute.xlu0 1
    %166 = vperm.xlu0 %165, %v30
    %v167 = vpop.permute.xlu0 %166
    %169 = vset.pattern.permute.xlu0 1
    %170 = vperm.xlu0 %169, %v31
    %v171 = vpop.permute.xlu0 %170
    %173 = vset.pattern.permute.xlu0 1
    %174 = vperm.xlu0 %173, %v32
    %v175 = vpop.permute.xlu0 %174
    %v177 = vmul.f32 %v163, %v157
    %v178 = vmul.f32 %v167, %v158
    %v179 = vmul.f32 %v171, %v159
    %v180 = vmul.f32 %v175, %v160
    %v181 = vadd.f32 %v131, %v177
    %v182 = vadd.f32 %v132, %v178
    %v183 = vadd.f32 %v133, %v179
    %v184 = vadd.f32 %v134, %v180
    %v185 = vadd.s32 %v46, 1
    %vm186 = vcmp.ge.s32.totalorder %v185, 0
    %vm187 = vcmp.lt.s32.totalorder %v185, 16
    %vm188 = vmand %vm186, %vm187
    %v189 = vsel %vm188, 1, 0
    %vm190 = vcmp.eq.s32.totalorder %v189, 1
    %191 = vrot.lane.b32.xlu0 %v97, 125
    %v192 = vpop.permute.xlu0 %191
    %193 = vrot.lane.b32.xlu0 %v98, 125
    %v194 = vpop.permute.xlu0 %193
    %195 = vrot.lane.b32.xlu0 %v99, 125
    %v196 = vpop.permute.xlu0 %195
    %197 = vrot.lane.b32.xlu0 %v100, 125
    %v198 = vpop.permute.xlu0 %197
    %v203 = vsel %vm190, %v192, 0.0
    %v204 = vsel %vm190, %v194, 0.0
    %v205 = vsel %vm190, %v196, 0.0
    %v206 = vsel %vm190, %v198, 0.0
    %207 = vset.pattern.permute.xlu0 3
    %208 = vperm.xlu0 %207, %v29
    %v209 = vpop.permute.xlu0 %208
    %211 = vset.pattern.permute.xlu0 3
    %212 = vperm.xlu0 %211, %v30
    %v213 = vpop.permute.xlu0 %212
    %215 = vset.pattern.permute.xlu0 3
    %216 = vperm.xlu0 %215, %v31
    %v217 = vpop.permute.xlu0 %216
    %219 = vset.pattern.permute.xlu0 3
    %220 = vperm.xlu0 %219, %v32
    %v221 = vpop.permute.xlu0 %220
    %v223 = vmul.f32 %v209, %v203
    %v224 = vmul.f32 %v213, %v204
    %v225 = vmul.f32 %v217, %v205
    %v226 = vmul.f32 %v221, %v206
    %v227 = vadd.f32 %v181, %v223
    %v228 = vadd.f32 %v182, %v224
    %v229 = vadd.f32 %v183, %v225
    %v230 = vadd.f32 %v184, %v226
    %v231 = vadd.s32 %v46, 2
    %vm232 = vcmp.ge.s32.totalorder %v231, 0
    %vm233 = vcmp.lt.s32.totalorder %v231, 16
    %vm234 = vmand %vm232, %vm233
    %v235 = vsel %vm234, 1, 0
    %vm236 = vcmp.eq.s32.totalorder %v235, 1
    %237 = vrot.lane.b32.xlu0 %v97, 124
    %v238 = vpop.permute.xlu0 %237
    %239 = vrot.lane.b32.xlu0 %v98, 124
    %v240 = vpop.permute.xlu0 %239
    %241 = vrot.lane.b32.xlu0 %v99, 124
    %v242 = vpop.permute.xlu0 %241
    %243 = vrot.lane.b32.xlu0 %v100, 124
    %v244 = vpop.permute.xlu0 %243
    %v249 = vsel %vm236, %v238, 0.0
    %v250 = vsel %vm236, %v240, 0.0
    %v251 = vsel %vm236, %v242, 0.0
    %v252 = vsel %vm236, %v244, 0.0
    %253 = vset.pattern.permute.xlu0 4
    %254 = vperm.xlu0 %253, %v29
    %v255 = vpop.permute.xlu0 %254
    %257 = vset.pattern.permute.xlu0 4
    %258 = vperm.xlu0 %257, %v30
    %v259 = vpop.permute.xlu0 %258
    %261 = vset.pattern.permute.xlu0 4
    %262 = vperm.xlu0 %261, %v31
    %v263 = vpop.permute.xlu0 %262
    %265 = vset.pattern.permute.xlu0 4
    %266 = vperm.xlu0 %265, %v32
    %v267 = vpop.permute.xlu0 %266
    %v269 = vmul.f32 %v255, %v249
    %v270 = vmul.f32 %v259, %v250
    %v271 = vmul.f32 %v263, %v251
    %v272 = vmul.f32 %v267, %v252
    %v273 = vadd.f32 %v227, %v269
    %v274 = vadd.f32 %v228, %v270
    %v275 = vadd.f32 %v229, %v271
    %v276 = vadd.f32 %v230, %v272
    %277 = vset.pattern.permute.xlu0 5
    %278 = vperm.xlu0 %277, %v29
    %v279 = vpop.permute.xlu0 %278
    %281 = vset.pattern.permute.xlu0 5
    %282 = vperm.xlu0 %281, %v30
    %v283 = vpop.permute.xlu0 %282
    %285 = vset.pattern.permute.xlu0 5
    %286 = vperm.xlu0 %285, %v31
    %v287 = vpop.permute.xlu0 %286
    %289 = vset.pattern.permute.xlu0 5
    %290 = vperm.xlu0 %289, %v32
    %v291 = vpop.permute.xlu0 %290
    %v293 = vadd.f32 %v273, %v279
    %v294 = vadd.f32 %v274, %v283
    %v295 = vadd.f32 %v275, %v287
    %v296 = vadd.f32 %v276, %v291
    %v297 = vmax.f32 %v293, 0.0
    %v298 = vmax.f32 %v294, 0.0
    %v299 = vmax.f32 %v295, 0.0
    %v300 = vmax.f32 %v296, 0.0
    %305 = vrot.lane.b32.xlu0 %v297, 2
    %v306 = vpop.permute.xlu0 %305
    %307 = vrot.lane.b32.xlu0 %v298, 2
    %v308 = vpop.permute.xlu0 %307
    %309 = vrot.lane.b32.xlu0 %v299, 2
    %v310 = vpop.permute.xlu0 %309
    %311 = vrot.lane.b32.xlu0 %v300, 2
    %v312 = vpop.permute.xlu0 %311
    %v317 = vsel %vm91, 0.0, %v306
    %v318 = vsel %vm91, 0.0, %v308
    %v319 = vsel %vm91, 0.0, %v310
    %v320 = vsel %vm91, 0.0, %v312
    %v321 = vsel %vm96, %v317, 0.0
    %v322 = vsel %vm96, %v318, 0.0
    %v323 = vsel %vm96, %v319, 0.0
    %v324 = vsel %vm96, %v320, 0.0
    %v325 = vsel %vm106, %v321, 0.0
    %v326 = vsel %vm106, %v322, 0.0
    %v327 = vsel %vm106, %v323, 0.0
    %v328 = vsel %vm106, %v324, 0.0
    %v329 = vadd.f32 %v297, %v325
    %v330 = vadd.f32 %v298, %v326
    %v331 = vadd.f32 %v299, %v327
    %v332 = vadd.f32 %v300, %v328
    %337 = vrot.lane.b32.xlu0 %v321, 127
    %v338 = vpop.permute.xlu0 %337
    %339 = vrot.lane.b32.xlu0 %v322, 127
    %v340 = vpop.permute.xlu0 %339
    %341 = vrot.lane.b32.xlu0 %v323, 127
    %v342 = vpop.permute.xlu0 %341
    %343 = vrot.lane.b32.xlu0 %v324, 127
    %v344 = vpop.permute.xlu0 %343
    %v349 = vsel %vm140, %v338, 0.0
    %v350 = vsel %vm140, %v340, 0.0
    %v351 = vsel %vm140, %v342, 0.0
    %v352 = vsel %vm140, %v344, 0.0
    %v353 = vadd.f32 %v329, %v349
    %v354 = vadd.f32 %v330, %v350
    %v355 = vadd.f32 %v331, %v351
    %v356 = vadd.f32 %v332, %v352
    %357 = vrot.lane.b32.xlu0 %v321, 125
    %v358 = vpop.permute.xlu0 %357
    %359 = vrot.lane.b32.xlu0 %v322, 125
    %v360 = vpop.permute.xlu0 %359
    %361 = vrot.lane.b32.xlu0 %v323, 125
    %v362 = vpop.permute.xlu0 %361
    %363 = vrot.lane.b32.xlu0 %v324, 125
    %v364 = vpop.permute.xlu0 %363
    %v369 = vsel %vm190, %v358, 0.0
    %v370 = vsel %vm190, %v360, 0.0
    %v371 = vsel %vm190, %v362, 0.0
    %v372 = vsel %vm190, %v364, 0.0
    %v373 = vadd.f32 %v353, %v369
    %v374 = vadd.f32 %v354, %v370
    %v375 = vadd.f32 %v355, %v371
    %v376 = vadd.f32 %v356, %v372
    %377 = vrot.lane.b32.xlu0 %v321, 124
    %v378 = vpop.permute.xlu0 %377
    %379 = vrot.lane.b32.xlu0 %v322, 124
    %v380 = vpop.permute.xlu0 %379
    %381 = vrot.lane.b32.xlu0 %v323, 124
    %v382 = vpop.permute.xlu0 %381
    %383 = vrot.lane.b32.xlu0 %v324, 124
    %v384 = vpop.permute.xlu0 %383
    %v389 = vsel %vm236, %v378, 0.0
    %v390 = vsel %vm236, %v380, 0.0
    %v391 = vsel %vm236, %v382, 0.0
    %v392 = vsel %vm236, %v384, 0.0
    %v393 = vadd.f32 %v373, %v389
    %v394 = vadd.f32 %v374, %v390
    %v395 = vadd.f32 %v375, %v391
    %v396 = vadd.f32 %v376, %v392
    %v397 = vmul.f32 %v393, 0.2
    %v398 = vmul.f32 %v394, 0.2
    %v399 = vmul.f32 %v395, 0.2
    %v400 = vmul.f32 %v396, 0.2
    %v401 = vld [vmem:[#allocation2] sm:$0xff]
    %v402 = vld [vmem:[#allocation2 + $0x8] sm:$0xff]
    %v403 = vld [vmem:[#allocation2 + $0x10] sm:$0xff]
    %v404 = vld [vmem:[#allocation2 + $0x18] sm:$0xff]
    %405 = vset.pattern.permute.xlu0 6
    %406 = vperm.xlu0 %405, %v29
    %v407 = vpop.permute.xlu0 %406
    %409 = vset.pattern.permute.xlu0 6
    %410 = vperm.xlu0 %409, %v30
    %v411 = vpop.permute.xlu0 %410
    %413 = vset.pattern.permute.xlu0 6
    %414 = vperm.xlu0 %413, %v31
    %v415 = vpop.permute.xlu0 %414
    %417 = vset.pattern.permute.xlu0 6
    %418 = vperm.xlu0 %417, %v32
    %v419 = vpop.permute.xlu0 %418
    %vm421 = vcmask 261120
    %v423 = vsel %vm421, %v401, 0
    %v426 = vsel %vm421, %v402, 0
    %v429 = vsel %vm421, %v403, 0
    %v432 = vsel %vm421, %v404, 0
    %434 = vmatprep.subr.mxu0 0.0
    %435 = vmatpush1.msra.mxu0 0.0
    %436 = vmatprep.subr.mxu0 0.0
    %437 = vmatpush1.msra.mxu0 0.0
    %438 = vmatprep.subr.mxu0 0.0
    %439 = vmatpush1.msra.mxu0 0.0
    %440 = vmatprep.subr.mxu0 0.0
    %441 = vmatpush1.msra.mxu0 0.0
    %442 = vmatprep.subr.mxu0 0.0
    %443 = vmatpush1.msra.mxu0 0.0
    %444 = vmatprep.subr.mxu0 0.0
    %445 = vmatpush1.msra.mxu0 0.0
    %446 = vmatprep.subr.mxu0 0.0
    %447 = vmatpush1.msra.mxu0 0.0
    %448 = vmatprep.subr.mxu0 0.0
    %449 = vmatpush1.msra.mxu0 0.0
    %450 = vmatprep.subr.mxu0 0.0
    %451 = vmatpush1.msra.mxu0 0.0
    %452 = vmatprep.subr.mxu0 0.0
    %453 = vmatpush1.msra.mxu0 0.0
    %454 = vmatprep.subr.mxu0 0.0
    %455 = vmatpush1.msra.mxu0 0.0
    %456 = vmatprep.subr.mxu0 0.0
    %457 = vmatpush1.msra.mxu0 0.0
    %458 = vmatprep.subr.mxu0 0.0
    %459 = vmatpush1.msra.mxu0 %v400
    %460 = vmatprep.subr.mxu0 0.0
    %461 = vmatpush1.msra.mxu0 %v399
    %462 = vmatprep.subr.mxu0 0.0
    %463 = vmatpush1.msra.mxu0 %v398
    %464 = vmatprep.subr.mxu0 0.0
    %465 = vmatpush1.msra.mxu0 %v397
    %466 = vmatprep.subr.mxu0 0.0
    %467 = vmatpush2.msra.mxu0 0.0
    %468 = vmatprep.subr.mxu0 0.0
    %469 = vmatpush2.msra.mxu0 0.0
    %470 = vmatprep.subr.mxu0 0.0
    %471 = vmatpush2.msra.mxu0 0.0
    %472 = vmatprep.subr.mxu0 0.0
    %473 = vmatpush2.msra.mxu0 0.0
    %474 = vmatprep.subr.mxu0 0.0
    %475 = vmatpush2.msra.mxu0 0.0
    %476 = vmatprep.subr.mxu0 0.0
    %477 = vmatpush2.msra.mxu0 0.0
    %478 = vmatprep.subr.mxu0 0.0
    %479 = vmatpush2.msra.mxu0 0.0
    %480 = vmatprep.subr.mxu0 0.0
    %481 = vmatpush2.msra.mxu0 0.0
    %482 = vmatprep.subr.mxu0 0.0
    %483 = vmatpush2.msra.mxu0 0.0
    %484 = vmatprep.subr.mxu0 0.0
    %485 = vmatpush2.msra.mxu0 0.0
    %486 = vmatprep.subr.mxu0 0.0
    %487 = vmatpush2.msra.mxu0 0.0
    %488 = vmatprep.subr.mxu0 0.0
    %489 = vmatpush2.msra.mxu0 0.0
    %490 = vmatprep.subr.mxu0 0.0
    %491 = vmatpush2.msra.mxu0 0.0
    %492 = vmatprep.subr.mxu0 0.0
    %493 = vmatpush2.msra.mxu0 0.0
    %494 = vmatprep.subr.mxu0 0.0
    %495 = vmatpush2.msra.mxu0 0.0
    %496 = vmatprep.subr.mxu0 0.0
    %497 = vmatpush2.msra.mxu0 0.0
    %498 = vmatprep.mubr.f32.mxu0 0.0
    %499 = vmatmul.mubr.f32.gmra.mxu0 %v423
    %v500 = vpop.f32.mrf.mxu0
    %v501 = vadd.f32 %v407, %v500
    %v502 = vpop.f32.mrf.mxu0
    %503 = vmatprep.mubr.f32.mxu0 0.0
    %504 = vmatmul.mubr.f32.gmra.mxu0 %v426
    %v505 = vpop.f32.mrf.mxu0
    %v506 = vadd.f32 %v411, %v505
    %v507 = vpop.f32.mrf.mxu0
    %508 = vmatprep.mubr.f32.mxu0 0.0
    %509 = vmatmul.mubr.f32.gmra.mxu0 %v429
    %v510 = vpop.f32.mrf.mxu0
    %v511 = vadd.f32 %v415, %v510
    %v512 = vpop.f32.mrf.mxu0
    %513 = vmatprep.mubr.f32.mxu0 0.0
    %514 = vmatmul.mubr.f32.gmra.mxu0 %v432
    %v515 = vpop.f32.mrf.mxu0
    %v516 = vadd.f32 %v419, %v515
    %v517 = vpop.f32.mrf.mxu0
    %518 = vdwg.mxu0
    %v519 = vsel %vm421, %v501, -inf
    %v520 = vsel %vm421, %v506, -inf
    %v521 = vsel %vm421, %v511, -inf
    %v522 = vsel %vm421, %v516, -inf
    %v523 = vmax.f32 %v519, %v520
    %v524 = vmax.f32 %v521, %v522
    %v525 = vmax.f32 %v523, %v524
    %v526 = vrot.slane %v525, 4
    %v527 = vmax.f32 %v525, %v526
    %v528 = vrot.slane %v527, 2
    %v529 = vmax.f32 %v527, %v528
    %v530 = vrot.slane %v529, 1
    %v531 = vmax.f32 %v529, %v530
    %v532 = vsub.f32 %v501, %v531
    %v533 = vsub.f32 %v506, %v531
    %v534 = vsub.f32 %v511, %v531
    %v535 = vsub.f32 %v516, %v531
    %v536 = vmul.f32 %v532, 1.442695
    %v537 = vpow.pop %v536
    %v538 = vmul.f32 %v533, 1.442695
    %v539 = vpow.pop %v538
    %v540 = vmul.f32 %v534, 1.442695
    %v541 = vpow.pop %v540
    %v542 = vmul.f32 %v535, 1.442695
    %v543 = vpow.pop %v542
    %v544 = vsel %vm421, %v537, 0.0
    %v545 = vsel %vm421, %v539, 0.0
    %v546 = vadd.f32 %v544, %v545
    %v547 = vsel %vm421, %v541, 0.0
    %v548 = vadd.f32 %v546, %v547
    %v549 = vsel %vm421, %v543, 0.0
    %v550 = vadd.f32 %v548, %v549
    %v551 = vrot.slane %v550, 4
    %v552 = vadd.f32 %v550, %v551
    %v553 = vrot.slane %v552, 2
    %v554 = vadd.f32 %v552, %v553
    %v555 = vrot.slane %v554, 1
    %v556 = vadd.f32 %v554, %v555
    %v557 = vrcp.pop %v556
    %v558 = vmul.f32 %v537, %v557
    %v559 = vmul.f32 %v539, %v557
    %v560 = vmul.f32 %v541, %v557
    %v561 = vmul.f32 %v543, %v557
    %v562 = vmax.f32 %v47, 0.0
    %v563 = vmax.f32 %v48, 0.0
    %v564 = vmax.f32 %v49, 0.0
    %v565 = vmax.f32 %v50, 0.0
    %v566 = vmul.f32 %v558, %v562
    %v567 = vmul.f32 %v559, %v563
    %v568 = vmul.f32 %v560, %v564
    %v569 = vmul.f32 %v561, %v565
    %570 = vst.msk [vmem:[#allocation5] sm:$0xff] %vm421, %v566
    %571 = vst.msk [vmem:[#allocation5 + $0x8] sm:$0xff] %vm421, %v567
    %572 = vst.msk [vmem:[#allocation5 + $0x10] sm:$0xff] %vm421, %v568
    %573 = vst.msk [vmem:[#allocation5 + $0x18] sm:$0xff] %vm421, %v569
    // Predicated region
    $region18: #{tpu_custom_call.1} parent=1 // pred_check
      _
    $region19: #{tpu_custom_call.1} parent=1 // pred_check_branch
      %575 = sbr.rel (0) target = $region21
    $region20: #{tpu_custom_call.1} parent=1 // pred_region
      %s577 = ssub.s32 512, 512
      %578 = vsyncadd [#allocation4], %s577
      %s579 = sshll.u32 [#allocation5], 4
      %s580 = int_to_ptr.vmem [resolvable:$true] %s579
      %585 = dma.vmem_to_hbm [thread:$0]  %s580, 512, %s3, [#allocation4], 128, 128, 8
    $region21: #{tpu_custom_call.1} parent=1 // pred_fallthru
      _
    // Predicated region
    $region22: #{tpu_custom_call.1} parent=1 // pred_check
      _
    $region23: #{tpu_custom_call.1} parent=1 // pred_check_branch
      %587 = sbr.rel (0) target = $region25
    $region24: #{tpu_custom_call.1} parent=1 // pred_region
      %588 = dma.done [#allocation4], 512
    $region25: #{tpu_custom_call.1} parent=1 // pred_fallthru
      _
    %589 = vsyncpa [#allocation3], 1
    %590 = vsyncpa [#allocation4], 1

</llo_original>
